<compile_context>
chip_gen: v5e
topology: v5e:2x2
jax: 0.10.0
libtpu: 0.0.40
codegen_flags: <defaults>
</compile_context>

<pallas_src>
import jax
import jax.numpy as jnp
from jax.experimental import pallas as pl
from jax.experimental.pallas import tpu as pltpu


def _mlp_kernel(xt_ref, p_ref, o_ref):
    """Fused MLP forward in transposed (lane-dense) layout.

    xt_ref: (F, N)        input, batch on the lane axis
    p_ref:  (H, F+O+2)    packed params: [:, :F]=W1 (H,F), [:, F]=b1,
                          [:, F+1:F+1+O]=W2^T (H,O), [:, F+1+O]=b2 (first O rows)
    o_ref:  (O, N)        output, batch on the lane axis
    """
    f, _ = xt_ref.shape
    o = o_ref.shape[0]

    xt = xt_ref[...]                      # (F, N)
    p = p_ref[...]                        # (H, F+O+2)

    w1 = p[:, 0:f]                        # (H, F)   (PyTorch hidden.weight layout)
    b1 = p[:, f:f + 1]                    # (H, 1)
    w2 = p[:, f + 1:f + 1 + o]            # (H, O)   (predict.weight transposed)
    b2 = p[:, f + 1 + o:f + 2 + o]        # (H, 1)   (first O rows valid)

    # Layer 1: hidden = relu(W1 @ x_t + b1) -> (H, N).
    # Tiny F: unrolled VPU broadcast multiply-adds (outer products), no MXU.
    acc = w1[:, 0:1] * xt[0:1, :]                       # (H, 1)*(1, N) -> (H, N)
    for i in range(1, f):
        acc = acc + w1[:, i:i + 1] * xt[i:i + 1, :]
    hidden = jnp.maximum(acc + b1, 0.0)                 # (H, N), VPU

    # Layer 2: out[k, :] = sum_h W2^T[h, k] * hidden[h, :] + b2[k].
    # Sublane reduction over H rows -> lane-dense (1, N) row written directly.
    for k in range(o):
        row = jnp.sum(hidden * w2[:, k:k + 1], axis=0, keepdims=True)  # (1, N)
        o_ref[k:k + 1, :] = (row + b2[k:k + 1, 0:1]).astype(o_ref.dtype)


@jax.jit
def net_forward(x, params):
    """x: (N, F) float32; params: (H, F+O+2) packed slab. Returns (N, O)."""
    n, f = x.shape
    o = params.shape[1] - f - 2
    vmem = pl.BlockSpec(memory_space=pltpu.MemorySpace.VMEM)
    out_t = pl.pallas_call(
        _mlp_kernel,
        out_shape=jax.ShapeDtypeStruct((o, n), jnp.float32),
        in_specs=[vmem, vmem],
        out_specs=vmem,
    )(x.T, params)          # x.T / out_t.T are pure reshapes for F = O = 1
    return out_t.T


def init_params(key, n_feature, n_hidden, n_output):
    """torch.nn.Linear-style U(-1/sqrt(fan_in), 1/sqrt(fan_in)) init, packed
    once into a single kernel-ready (H, F+O+2) slab (one DMA per call)."""
    k1, k2, k3, k4 = jax.random.split(key, 4)
    lim1 = 1.0 / jnp.sqrt(jnp.float32(n_feature))
    lim2 = 1.0 / jnp.sqrt(jnp.float32(n_hidden))
    w1 = jax.random.uniform(k1, (n_hidden, n_feature), jnp.float32, -lim1, lim1)  # (H, F)
    b1 = jax.random.uniform(k2, (n_hidden, 1), jnp.float32, -lim1, lim1)          # (H, 1)
    w2 = jax.random.uniform(k3, (n_hidden, n_output), jnp.float32, -lim2, lim2)   # (H, O)
    b2 = jax.random.uniform(k4, (n_output,), jnp.float32, -lim2, lim2)            # (O,)
    b2_col = jnp.zeros((n_hidden, 1), jnp.float32).at[:n_output, 0].set(b2)       # (H, 1)
    return jnp.concatenate([w1, b1, w2, b2_col], axis=1)                          # (H, F+O+2)


if __name__ == "__main__":
    # Same setup as the original script: x = torch.unsqueeze(linspace(-1, 1, 100), 1)
    n_feature, n_hidden, n_output = 1, 10, 1
    n = 100

    key = jax.random.PRNGKey(0)
    params = init_params(key, n_feature, n_hidden, n_output)

    x = jnp.linspace(-1.0, 1.0, n, dtype=jnp.float32)[:, None]  # (100, 1)

    y = net_forward(x, params)
    y = jax.block_until_ready(y)

    # Pure-JAX reference check of the fused kernel (unpack the slab).
    F, O = n_feature, n_output
    w1 = params[:, :F]                  # (H, F)
    b1 = params[:, F:F + 1]             # (H, 1)
    w2 = params[:, F + 1:F + 1 + O]     # (H, O)
    b2 = params[:O, F + 1 + O]          # (O,)
    ref = jnp.maximum(x @ w1.T + b1.T, 0.0) @ w2 + b2[None, :]

    assert y.shape == (n, n_output)
    assert jnp.allclose(y, ref, atol=1e-5, rtol=1e-5)

    print("KERNEL_OK")
</pallas_src>

<mosaic_0001>
module attributes {stable_mosaic.version = 11 : i64} {
  func.func @_mlp_kernel(%arg0: memref<1x100xf32, #tpu.memory_space<vmem>>, %arg1: memref<10x4xf32, #tpu.memory_space<vmem>>, %arg2: memref<1x100xf32, #tpu.memory_space<vmem>>) attributes {dimension_semantics = [], scalar_prefetch = 0 : i64, scratch_operands = 0 : i64, tpu.core_type = #tpu.core_type<tc>} {
    %c0 = arith.constant 0 : index
    %c0_0 = arith.constant 0 : index
    %0 = vector.load %arg0[%c0, %c0_0] : memref<1x100xf32, #tpu.memory_space<vmem>>, vector<1x100xf32>
    %c0_1 = arith.constant 0 : index
    %c0_2 = arith.constant 0 : index
    %1 = vector.load %arg1[%c0_1, %c0_2] : memref<10x4xf32, #tpu.memory_space<vmem>>, vector<10x4xf32>
    %2 = vector.extract_strided_slice %1 {offsets = [0, 0], sizes = [10, 1], strides = [1, 1]} : vector<10x4xf32> to vector<10x1xf32>
    %3 = vector.extract_strided_slice %1 {offsets = [0, 1], sizes = [10, 1], strides = [1, 1]} : vector<10x4xf32> to vector<10x1xf32>
    %4 = vector.extract_strided_slice %1 {offsets = [0, 2], sizes = [10, 1], strides = [1, 1]} : vector<10x4xf32> to vector<10x1xf32>
    %5 = vector.extract_strided_slice %1 {offsets = [0, 3], sizes = [10, 1], strides = [1, 1]} : vector<10x4xf32> to vector<10x1xf32>
    %6 = vector.broadcast %2 : vector<10x1xf32> to vector<10x100xf32>
    %7 = vector.broadcast %0 : vector<1x100xf32> to vector<10x100xf32>
    %8 = arith.mulf %6, %7 : vector<10x100xf32>
    %9 = vector.broadcast %3 : vector<10x1xf32> to vector<10x100xf32>
    %10 = arith.addf %8, %9 : vector<10x100xf32>
    %cst = arith.constant 0.000000e+00 : f32
    %11 = vector.broadcast %cst : f32 to vector<10x100xf32>
    %12 = arith.maximumf %10, %11 : vector<10x100xf32>
    %13 = vector.broadcast %4 : vector<10x1xf32> to vector<10x100xf32>
    %14 = arith.mulf %12, %13 : vector<10x100xf32>
    %cst_3 = arith.constant dense<0.000000e+00> : vector<100xf32>
    %15 = vector.multi_reduction <add>, %14, %cst_3 [0] : vector<10x100xf32> to vector<100xf32>
    %16 = vector.shape_cast %15 : vector<100xf32> to vector<1x100xf32>
    %17 = vector.extract_strided_slice %5 {offsets = [0, 0], sizes = [1, 1], strides = [1, 1]} : vector<10x1xf32> to vector<1x1xf32>
    %18 = vector.broadcast %17 : vector<1x1xf32> to vector<1x100xf32>
    %19 = arith.addf %16, %18 : vector<1x100xf32>
    %c0_4 = arith.constant 0 : index
    %c0_5 = arith.constant 0 : index
    %20 = vector.load %arg2[%c0_4, %c0_5] : memref<1x100xf32, #tpu.memory_space<vmem>>, vector<1x100xf32>
    tpu.vector_store %arg2[%c0_4, %c0_5], %19 {strides = array<i32>} : memref<1x100xf32, #tpu.memory_space<vmem>>, vector<1x100xf32>,
    return
  }
}

</mosaic_0001>

<llo_original>
// kernel: net_forward.1
$region0: #{net_forward.1}
  #allocation0 [shape = 'u32[]', space=smem, size = 0x4, offset = 0x4, fixed_abs, tag = 'smem constant byte address 0x4 - core index']
  #allocation1 [shape = 'u32[72,128]{1,0:T(1,128)}', space=vmem, size = 0x9000, scoped, tag = 'internal scratch']
  %s0 = inlined_call_operand.vmem [shape: f32[1,100], index: 0, kind: input, shape index: {}]
  %s1 = inlined_call_operand.vmem [shape: f32[10,4], index: 1, kind: input, shape index: {}]
  %s2 = inlined_call_operand.hbm [shape: f32[1,100], index: 2, kind: output, shape index: {}]
  %s3 = sld [smem:[#allocation0]]
  $region18: #{net_forward.1} parent=0
    _
  %s5 = ssub.s32 1, %s3
  %s6 = scalar_select 0, %s5, %s3
  $region1: #{net_forward.1} parent=0
    #allocation2 [shape = 'u8[512]{0}', space=vmem, size = 0x400, scoped, tag = 'output window, operand 0, single buffered']
    #allocation3 [shape = 's32[1]{0}', space=sflag, size = 0x4, scoped, tag = 'scoped memory for net_forward.1']
    %7 = vsyncpa [#allocation3], 0
    // Predicated region
    $region2: #{net_forward.1} parent=1 // pred_check
      _
    $region3: #{net_forward.1} parent=1 // pred_check_branch
      %9 = sbr.rel (0) target = $region5
    $region4: #{net_forward.1} parent=1 // pred_region
      _
    $region5: #{net_forward.1} parent=1 // pred_fallthru
      _
    // Predicated region
    $region6: #{net_forward.1} parent=1 // pred_check
      _
    $region7: #{net_forward.1} parent=1 // pred_check_branch
      %11 = sbr.rel (0) target = $region9
    $region8: #{net_forward.1} parent=1 // pred_region
      _
    $region9: #{net_forward.1} parent=1 // pred_fallthru
      _
    %v12 = vld [vmem:[%s0] sm:$0x1]
    %v13 = vld [vmem:[%s1] sm:$0xff]
    %v14 = vld [vmem:[%s1 + $0x8] sm:$0x3]
    %16 = vset.pattern.permute.xlu0 0
    %17 = vperm.xlu0 %16, %v13
    %v18 = vpop.permute.xlu0 %17
    %21 = vset.pattern.permute.xlu0 0
    %22 = vperm.xlu0 %21, %v14
    %v23 = vpop.permute.xlu0 %22
    %v26 = vperm.slane %v12, 0
    %v28 = vmul.f32 %v18, %v26
    %v29 = vmul.f32 %v23, %v26
    %30 = vset.pattern.permute.xlu0 1
    %31 = vperm.xlu0 %30, %v13
    %v32 = vpop.permute.xlu0 %31
    %34 = vset.pattern.permute.xlu0 1
    %35 = vperm.xlu0 %34, %v14
    %v36 = vpop.permute.xlu0 %35
    %v38 = vadd.f32 %v28, %v32
    %v39 = vadd.f32 %v29, %v36
    %v40 = vmax.f32 %v38, 0.0
    %v41 = vmax.f32 %v39, 0.0
    %42 = vset.pattern.permute.xlu0 2
    %43 = vperm.xlu0 %42, %v13
    %v44 = vpop.permute.xlu0 %43
    %46 = vset.pattern.permute.xlu0 2
    %47 = vperm.xlu0 %46, %v14
    %v48 = vpop.permute.xlu0 %47
    %v50 = vmul.f32 %v40, %v44
    %v51 = vmul.f32 %v41, %v48
    %vm52 = vcmask 818176
    %v53 = vsel %vm52, %v50, 0.0
    %vm54 = vcmask 812032
    %v55 = vsel %vm54, %v51, 0.0
    %v56 = vadd.f32 %v53, %v55
    %v57 = vrot.slane %v56, 4
    %v58 = vadd.f32 %v56, %v57
    %v59 = vrot.slane %v58, 2
    %v60 = vadd.f32 %v58, %v59
    %v61 = vrot.slane %v60, 1
    %v62 = vadd.f32 %v60, %v61
    %63 = vset.pattern.permute.xlu0 3
    %64 = vperm.xlu0 %63, %v13
    %v65 = vpop.permute.xlu0 %64
    %v67 = vadd.f32 %v62, %v65
    %vm68 = vcmask 811008
    %69 = vst.msk [vmem:[#allocation2] sm:$0x1] %vm68, %v67
    // Predicated region
    $region10: #{net_forward.1} parent=1 // pred_check
      _
    $region11: #{net_forward.1} parent=1 // pred_check_branch
      %71 = sbr.rel (0) target = $region13
    $region12: #{net_forward.1} parent=1 // pred_region
      %73 = vsyncadd [#allocation3], 0
      %s75 = sshll.u32 [#allocation2], 4
      %s76 = int_to_ptr.vmem [resolvable:$true] %s75
      %s77 = sshll.u32 %s2, 4
      %s78 = int_to_ptr.hbm [resolvable:$true] %s77
      %80 = dma.vmem_to_hbm [thread:$0]  %s76, 16, %s78, [#allocation3]
    $region13: #{net_forward.1} parent=1 // pred_fallthru
      _
    // Predicated region
    $region14: #{net_forward.1} parent=1 // pred_check
      _
    $region15: #{net_forward.1} parent=1 // pred_check_branch
      %82 = sbr.rel (0) target = $region17
    $region16: #{net_forward.1} parent=1 // pred_region
      %84 = dma.done [#allocation3], 16
    $region17: #{net_forward.1} parent=1 // pred_fallthru
      _
    %85 = vsyncpa [#allocation3], 1

</llo_original>
